<compile_context>
chip_gen: v6e
topology: v6e:2x2x1
jax: 0.10.0
libtpu: 0.0.40
codegen_flags: <defaults>
</compile_context>

<pallas_src>
import functools

import jax
import jax.numpy as jnp
from jax.experimental import pallas as pl
from jax.experimental.pallas import tpu as pltpu


def _round_up(x, m):
    return (x + m - 1) // m * m


def _cdiv(a, b):
    return (a + b - 1) // b


def _mlp_kernel(x_ref,
                w1_ref, b1_ref,
                w2_ref, b2_ref,
                w3_ref, b3_ref,
                w4_ref, b4_ref,
                wc_ref, bc_ref,
                o_ref):
    """Fused MLP forward for one batch tile (5 matmuls + 4 ReLUs).

    x arrives f32 with its natural (unpadded) feature dim and is cast to bf16
    in-kernel; all matmuls run bf16 on the MXU with f32 accumulation; bias-add
    and ReLU stay in f32.  Output is stored lane-dense in bf16.
    """

    def layer(h_bf16, w_ref, b_ref):
        acc = jnp.dot(h_bf16, w_ref[...], preferred_element_type=jnp.float32)
        acc = jnp.maximum(acc + b_ref[...], 0.0)          # bias + ReLU in f32
        return acc.astype(jnp.bfloat16)                    # bf16 operand for next MXU pass

    h = x_ref[...].astype(jnp.bfloat16)
    h = layer(h, w1_ref, b1_ref)
    h = layer(h, w2_ref, b2_ref)
    h = layer(h, w3_ref, b3_ref)
    h = layer(h, w4_ref, b4_ref)

    logits = jnp.dot(h, wc_ref[...], preferred_element_type=jnp.float32) + bc_ref[...]
    o_ref[...] = logits.astype(o_ref.dtype)                # bf16, lane-dense (padded) store

    # TODO(synk): training-mode dropout (p=[0.5,0.5,0.3,0.3]) could be added via
    # pltpu.prng_seed / pltpu.stateful_bernoulli; inference uses identity.


def prepare_params(params):
    """Pad + cast parameters ONCE (outside the per-call hot path).

    Weights -> bf16 with output dims padded to multiples of 128 (lane-dense);
    the first-layer contraction dim stays unpadded (x is fed unpadded).
    Biases -> f32, padded to the same lane widths.  Zero padding is exact:
    padded output lanes are ReLU(0 + 0) = 0 and the matching input rows of the
    next layer's weights are zero.
    """
    w_names = ["w1", "w2", "w3", "w4", "wc"]
    b_names = ["b1", "b2", "b3", "b4", "bc"]
    dims = [params["w1"].shape[0]] + [params[n].shape[1] for n in w_names]
    dp = [dims[0]] + [_round_up(d, 128) for d in dims[1:]]

    prepared = {}
    for i, (wn, bn) in enumerate(zip(w_names, b_names)):
        w, b = params[wn], params[bn]
        prepared[wn] = jnp.pad(
            w, ((0, dp[i] - w.shape[0]), (0, dp[i + 1] - w.shape[1]))
        ).astype(jnp.bfloat16)
        prepared[bn] = jnp.pad(
            b, ((0, 0), (0, dp[i + 1] - b.shape[1]))
        ).astype(jnp.float32)
    return prepared


@functools.partial(jax.jit, static_argnames=("num_classes", "batch_tile"))
def genetic_model_forward(x, prepared, num_classes=3, batch_tile=None):
    """x: [B, input_size] float32; prepared: output of prepare_params()."""
    B, D_in = x.shape
    dp_out = prepared["bc"].shape[1]                       # padded class-lane width (>=128)

    # --- batch tiling ---------------------------------------------------------
    if batch_tile is None:
        if B < 256:
            # whole batch as one block; >=16 rows for bf16 sublane packing
            batch_tile = _round_up(max(B, 16), 16)
        else:
            # Largest multiple-of-16 tile <= 2048 that keeps an even (>=2)
            # number of grid steps, so both v7x TensorCores get work while
            # per-step overhead stays amortized.
            n_steps = 2 * _cdiv(B, 2 * 2048)
            batch_tile = _round_up(_cdiv(B, n_steps), 16)
    grid = (_cdiv(B, batch_tile),)                          # ragged tail block is masked

    param_keys = ["w1", "b1", "w2", "b2", "w3", "b3", "w4", "b4", "wc", "bc"]
    param_args = [prepared[k] for k in param_keys]

    def full_spec(a):
        # tiny, VMEM-resident params: full array, constant block index
        return pl.BlockSpec(a.shape, lambda i: (0, 0))

    out_padded = pl.pallas_call(
        _mlp_kernel,
        out_shape=jax.ShapeDtypeStruct((B, dp_out), jnp.bfloat16),
        grid_spec=pltpu.PrefetchScalarGridSpec(
            num_scalar_prefetch=0,
            grid=grid,
            in_specs=[pl.BlockSpec((batch_tile, D_in), lambda i: (i, 0))]  # x tile (f32, unpadded K)
                     + [full_spec(a) for a in param_args],
            out_specs=pl.BlockSpec((batch_tile, dp_out), lambda i: (i, 0)),
        ),
        compiler_params=pltpu.CompilerParams(
            dimension_semantics=("parallel",),
            vmem_limit_bytes=32 * 1024 * 1024,
        ),
    )(x, *param_args)

    # Drop the padded class lanes; return f32 logits like the PyTorch module.
    return out_padded[:, :num_classes].astype(jnp.float32)


def init_params(key, input_size, hidden_sizes=(128, 64, 32, 32), num_classes=3):
    """Deterministic synthetic init (scaled-normal); layout [in, out]."""
    sizes = [input_size] + list(hidden_sizes) + [num_classes]
    names = ["w1", "w2", "w3", "w4", "wc"]
    bnames = ["b1", "b2", "b3", "b4", "bc"]
    params = {}
    for n, bn, (fan_in, fan_out) in zip(names, bnames, zip(sizes[:-1], sizes[1:])):
        key, kw, kb = jax.random.split(key, 3)
        scale = 1.0 / jnp.sqrt(jnp.float32(fan_in))
        params[n] = jax.random.normal(kw, (fan_in, fan_out), jnp.float32) * scale
        params[bn] = jax.random.normal(kb, (1, fan_out), jnp.float32) * scale
    return params


def reference_forward(x, params):
    """Plain-JAX f32 reference of the same forward pass."""
    h = x
    for w, b in [(params["w1"], params["b1"]),
                 (params["w2"], params["b2"]),
                 (params["w3"], params["b3"]),
                 (params["w4"], params["b4"])]:
        h = jnp.maximum(h @ w + b, 0.0)
    return h @ params["wc"] + params["bc"]


if __name__ == "__main__":
    key = jax.random.PRNGKey(0)
    kx, kx2, kp = jax.random.split(key, 3)

    batch, input_size, num_classes = 16, 64, 3
    x = jax.random.normal(kx, (batch, input_size), jnp.float32)
    params = init_params(kp, input_size, num_classes=num_classes)
    prepared = prepare_params(params)        # one-time pad/cast, outside the hot path

    # Default path: whole batch as one lane-dense block.
    out = jax.block_until_ready(
        genetic_model_forward(x, prepared, num_classes=num_classes))
    # Multi-step grid path (exercises batch tiling / index_map).
    out_tiled = jax.block_until_ready(
        genetic_model_forward(x, prepared, num_classes=num_classes, batch_tile=8))
    # Ragged batch (B not a multiple of the tile) exercises masked tail handling.
    x2 = jax.random.normal(kx2, (21, input_size), jnp.float32)
    out_ragged = jax.block_until_ready(
        genetic_model_forward(x2, prepared, num_classes=num_classes))

    ref = reference_forward(x, params)
    ref2 = reference_forward(x2, params)
    assert out.shape == (batch, num_classes), out.shape
    assert out_ragged.shape == (21, num_classes), out_ragged.shape
    # bf16 matmul operands + bf16 logits store -> loosened tolerance vs f32 ref.
    assert jnp.max(jnp.abs(out - ref)) < 1e-1, "mismatch vs reference"
    assert jnp.max(jnp.abs(out_tiled - ref)) < 1e-1, "mismatch vs reference (tiled)"
    assert jnp.max(jnp.abs(out_ragged - ref2)) < 1e-1, "mismatch vs reference (ragged)"
    assert jnp.max(jnp.abs(out - out_tiled)) < 5e-2, "tile-size dependence"

    print("KERNEL_OK")
</pallas_src>

<mosaic_0001>
module attributes {stable_mosaic.version = 11 : i64} {
  func.func @_mlp_kernel(%arg0: i32, %arg1: memref<16x64xf32, #tpu.memory_space<vmem>>, %arg2: memref<64x128xbf16, #tpu.memory_space<vmem>>, %arg3: memref<1x128xf32, #tpu.memory_space<vmem>>, %arg4: memref<128x128xbf16, #tpu.memory_space<vmem>>, %arg5: memref<1x128xf32, #tpu.memory_space<vmem>>, %arg6: memref<128x128xbf16, #tpu.memory_space<vmem>>, %arg7: memref<1x128xf32, #tpu.memory_space<vmem>>, %arg8: memref<128x128xbf16, #tpu.memory_space<vmem>>, %arg9: memref<1x128xf32, #tpu.memory_space<vmem>>, %arg10: memref<128x128xbf16, #tpu.memory_space<vmem>>, %arg11: memref<1x128xf32, #tpu.memory_space<vmem>>, %arg12: memref<16x128xbf16, #tpu.memory_space<vmem>>) attributes {dimension_semantics = [#tpu.dimension_semantics<parallel>], iteration_bounds = array<i64: 1>, scalar_prefetch = 0 : i64, scratch_operands = 0 : i64, tpu.core_type = #tpu.core_type<tc>, window_params = [{transform_indices = @transform_0, window_bounds = array<i64: 16, 64>}, {pipeline_mode = #tpu.pipeline_mode<synchronous>, transform_indices = @transform_1, window_bounds = array<i64: 64, 128>}, {pipeline_mode = #tpu.pipeline_mode<synchronous>, transform_indices = @transform_2, window_bounds = array<i64: 1, 128>}, {pipeline_mode = #tpu.pipeline_mode<synchronous>, transform_indices = @transform_3, window_bounds = array<i64: 128, 128>}, {pipeline_mode = #tpu.pipeline_mode<synchronous>, transform_indices = @transform_4, window_bounds = array<i64: 1, 128>}, {pipeline_mode = #tpu.pipeline_mode<synchronous>, transform_indices = @transform_5, window_bounds = array<i64: 128, 128>}, {pipeline_mode = #tpu.pipeline_mode<synchronous>, transform_indices = @transform_6, window_bounds = array<i64: 1, 128>}, {pipeline_mode = #tpu.pipeline_mode<synchronous>, transform_indices = @transform_7, window_bounds = array<i64: 128, 128>}, {pipeline_mode = #tpu.pipeline_mode<synchronous>, transform_indices = @transform_8, window_bounds = array<i64: 1, 128>}, {pipeline_mode = #tpu.pipeline_mode<synchronous>, transform_indices = @transform_9, window_bounds = array<i64: 128, 128>}, {pipeline_mode = #tpu.pipeline_mode<synchronous>, transform_indices = @transform_10, window_bounds = array<i64: 1, 128>}, {transform_indices = @transform_11, window_bounds = array<i64: 16, 128>}]} {
    %c0 = arith.constant 0 : index
    %c0_0 = arith.constant 0 : index
    %0 = vector.load %arg1[%c0, %c0_0] : memref<16x64xf32, #tpu.memory_space<vmem>>, vector<16x64xf32>
    %1 = arith.truncf %0 : vector<16x64xf32> to vector<16x64xbf16>
    %c0_1 = arith.constant 0 : index
    %c0_2 = arith.constant 0 : index
    %2 = vector.load %arg2[%c0_1, %c0_2] : memref<64x128xbf16, #tpu.memory_space<vmem>>, vector<64x128xbf16>
    %cst = arith.constant dense<0.000000e+00> : vector<16x128xf32>
    %3 = tpu.matmul %1, %2, %cst {dimension_numbers = #tpu.dot_dimension_numbers<[1], [0], [0], [1], [0, 0, 1, 1], [], []>} : vector<16x64xbf16>, vector<64x128xbf16>, vector<16x128xf32> -> vector<16x128xf32>
    %c0_3 = arith.constant 0 : index
    %c0_4 = arith.constant 0 : index
    %4 = vector.load %arg3[%c0_3, %c0_4] : memref<1x128xf32, #tpu.memory_space<vmem>>, vector<1x128xf32>
    %5 = vector.broadcast %4 : vector<1x128xf32> to vector<16x128xf32>
    %6 = arith.addf %3, %5 : vector<16x128xf32>
    %cst_5 = arith.constant 0.000000e+00 : f32
    %7 = vector.broadcast %cst_5 : f32 to vector<16x128xf32>
    %8 = arith.maximumf %6, %7 : vector<16x128xf32>
    %9 = arith.truncf %8 : vector<16x128xf32> to vector<16x128xbf16>
    %c0_6 = arith.constant 0 : index
    %c0_7 = arith.constant 0 : index
    %10 = vector.load %arg4[%c0_6, %c0_7] : memref<128x128xbf16, #tpu.memory_space<vmem>>, vector<128x128xbf16>
    %cst_8 = arith.constant dense<0.000000e+00> : vector<16x128xf32>
    %11 = tpu.matmul %9, %10, %cst_8 {dimension_numbers = #tpu.dot_dimension_numbers<[1], [0], [0], [1], [0, 0, 1, 1], [], []>} : vector<16x128xbf16>, vector<128x128xbf16>, vector<16x128xf32> -> vector<16x128xf32>
    %c0_9 = arith.constant 0 : index
    %c0_10 = arith.constant 0 : index
    %12 = vector.load %arg5[%c0_9, %c0_10] : memref<1x128xf32, #tpu.memory_space<vmem>>, vector<1x128xf32>
    %13 = vector.broadcast %12 : vector<1x128xf32> to vector<16x128xf32>
    %14 = arith.addf %11, %13 : vector<16x128xf32>
    %cst_11 = arith.constant 0.000000e+00 : f32
    %15 = vector.broadcast %cst_11 : f32 to vector<16x128xf32>
    %16 = arith.maximumf %14, %15 : vector<16x128xf32>
    %17 = arith.truncf %16 : vector<16x128xf32> to vector<16x128xbf16>
    %c0_12 = arith.constant 0 : index
    %c0_13 = arith.constant 0 : index
    %18 = vector.load %arg6[%c0_12, %c0_13] : memref<128x128xbf16, #tpu.memory_space<vmem>>, vector<128x128xbf16>
    %cst_14 = arith.constant dense<0.000000e+00> : vector<16x128xf32>
    %19 = tpu.matmul %17, %18, %cst_14 {dimension_numbers = #tpu.dot_dimension_numbers<[1], [0], [0], [1], [0, 0, 1, 1], [], []>} : vector<16x128xbf16>, vector<128x128xbf16>, vector<16x128xf32> -> vector<16x128xf32>
    %c0_15 = arith.constant 0 : index
    %c0_16 = arith.constant 0 : index
    %20 = vector.load %arg7[%c0_15, %c0_16] : memref<1x128xf32, #tpu.memory_space<vmem>>, vector<1x128xf32>
    %21 = vector.broadcast %20 : vector<1x128xf32> to vector<16x128xf32>
    %22 = arith.addf %19, %21 : vector<16x128xf32>
    %cst_17 = arith.constant 0.000000e+00 : f32
    %23 = vector.broadcast %cst_17 : f32 to vector<16x128xf32>
    %24 = arith.maximumf %22, %23 : vector<16x128xf32>
    %25 = arith.truncf %24 : vector<16x128xf32> to vector<16x128xbf16>
    %c0_18 = arith.constant 0 : index
    %c0_19 = arith.constant 0 : index
    %26 = vector.load %arg8[%c0_18, %c0_19] : memref<128x128xbf16, #tpu.memory_space<vmem>>, vector<128x128xbf16>
    %cst_20 = arith.constant dense<0.000000e+00> : vector<16x128xf32>
    %27 = tpu.matmul %25, %26, %cst_20 {dimension_numbers = #tpu.dot_dimension_numbers<[1], [0], [0], [1], [0, 0, 1, 1], [], []>} : vector<16x128xbf16>, vector<128x128xbf16>, vector<16x128xf32> -> vector<16x128xf32>
    %c0_21 = arith.constant 0 : index
    %c0_22 = arith.constant 0 : index
    %28 = vector.load %arg9[%c0_21, %c0_22] : memref<1x128xf32, #tpu.memory_space<vmem>>, vector<1x128xf32>
    %29 = vector.broadcast %28 : vector<1x128xf32> to vector<16x128xf32>
    %30 = arith.addf %27, %29 : vector<16x128xf32>
    %cst_23 = arith.constant 0.000000e+00 : f32
    %31 = vector.broadcast %cst_23 : f32 to vector<16x128xf32>
    %32 = arith.maximumf %30, %31 : vector<16x128xf32>
    %33 = arith.truncf %32 : vector<16x128xf32> to vector<16x128xbf16>
    %c0_24 = arith.constant 0 : index
    %c0_25 = arith.constant 0 : index
    %34 = vector.load %arg10[%c0_24, %c0_25] : memref<128x128xbf16, #tpu.memory_space<vmem>>, vector<128x128xbf16>
    %cst_26 = arith.constant dense<0.000000e+00> : vector<16x128xf32>
    %35 = tpu.matmul %33, %34, %cst_26 {dimension_numbers = #tpu.dot_dimension_numbers<[1], [0], [0], [1], [0, 0, 1, 1], [], []>} : vector<16x128xbf16>, vector<128x128xbf16>, vector<16x128xf32> -> vector<16x128xf32>
    %c0_27 = arith.constant 0 : index
    %c0_28 = arith.constant 0 : index
    %36 = vector.load %arg11[%c0_27, %c0_28] : memref<1x128xf32, #tpu.memory_space<vmem>>, vector<1x128xf32>
    %37 = vector.broadcast %36 : vector<1x128xf32> to vector<16x128xf32>
    %38 = arith.addf %35, %37 : vector<16x128xf32>
    %39 = arith.truncf %38 : vector<16x128xf32> to vector<16x128xbf16>
    %c0_29 = arith.constant 0 : index
    %c0_30 = arith.constant 0 : index
    %40 = vector.load %arg12[%c0_29, %c0_30] : memref<16x128xbf16, #tpu.memory_space<vmem>>, vector<16x128xbf16>
    tpu.vector_store %arg12[%c0_29, %c0_30], %39 {strides = array<i32>} : memref<16x128xbf16, #tpu.memory_space<vmem>>, vector<16x128xbf16>,
    return
  }
  func.func @transform_0(%arg0: i32) -> (i32, i32) {
    %c0_i32 = arith.constant 0 : i32
    %c0_i32_0 = arith.constant 0 : i32
    return %arg0, %c0_i32 : i32, i32
  }
  func.func @transform_1(%arg0: i32) -> (i32, i32) {
    %c0_i32 = arith.constant 0 : i32
    %c0_i32_0 = arith.constant 0 : i32
    %c0_i32_1 = arith.constant 0 : i32
    return %c0_i32, %c0_i32_0 : i32, i32
  }
  func.func @transform_2(%arg0: i32) -> (i32, i32) {
    %c0_i32 = arith.constant 0 : i32
    %c0_i32_0 = arith.constant 0 : i32
    %c0_i32_1 = arith.constant 0 : i32
    return %c0_i32, %c0_i32_0 : i32, i32
  }
  func.func @transform_3(%arg0: i32) -> (i32, i32) {
    %c0_i32 = arith.constant 0 : i32
    %c0_i32_0 = arith.constant 0 : i32
    %c0_i32_1 = arith.constant 0 : i32
    return %c0_i32, %c0_i32_0 : i32, i32
  }
  func.func @transform_4(%arg0: i32) -> (i32, i32) {
    %c0_i32 = arith.constant 0 : i32
    %c0_i32_0 = arith.constant 0 : i32
    %c0_i32_1 = arith.constant 0 : i32
    return %c0_i32, %c0_i32_0 : i32, i32
  }
  func.func @transform_5(%arg0: i32) -> (i32, i32) {
    %c0_i32 = arith.constant 0 : i32
    %c0_i32_0 = arith.constant 0 : i32
    %c0_i32_1 = arith.constant 0 : i32
    return %c0_i32, %c0_i32_0 : i32, i32
  }
  func.func @transform_6(%arg0: i32) -> (i32, i32) {
    %c0_i32 = arith.constant 0 : i32
    %c0_i32_0 = arith.constant 0 : i32
    %c0_i32_1 = arith.constant 0 : i32
    return %c0_i32, %c0_i32_0 : i32, i32
  }
  func.func @transform_7(%arg0: i32) -> (i32, i32) {
    %c0_i32 = arith.constant 0 : i32
    %c0_i32_0 = arith.constant 0 : i32
    %c0_i32_1 = arith.constant 0 : i32
    return %c0_i32, %c0_i32_0 : i32, i32
  }
  func.func @transform_8(%arg0: i32) -> (i32, i32) {
    %c0_i32 = arith.constant 0 : i32
    %c0_i32_0 = arith.constant 0 : i32
    %c0_i32_1 = arith.constant 0 : i32
    return %c0_i32, %c0_i32_0 : i32, i32
  }
  func.func @transform_9(%arg0: i32) -> (i32, i32) {
    %c0_i32 = arith.constant 0 : i32
    %c0_i32_0 = arith.constant 0 : i32
    %c0_i32_1 = arith.constant 0 : i32
    return %c0_i32, %c0_i32_0 : i32, i32
  }
  func.func @transform_10(%arg0: i32) -> (i32, i32) {
    %c0_i32 = arith.constant 0 : i32
    %c0_i32_0 = arith.constant 0 : i32
    %c0_i32_1 = arith.constant 0 : i32
    return %c0_i32, %c0_i32_0 : i32, i32
  }
  func.func @transform_11(%arg0: i32) -> (i32, i32) {
    %c0_i32 = arith.constant 0 : i32
    %c0_i32_0 = arith.constant 0 : i32
    return %arg0, %c0_i32 : i32, i32
  }
}

</mosaic_0001>

<llo_original>
// kernel: genetic_model_forward.1
$region0: #{genetic_model_forward.1}
  #allocation0 [shape = 'u32[]', space=smem, size = 0x4, offset = 0x4, fixed_abs, tag = 'smem constant byte address 0x4 - core index']
  #allocation1 [shape = 'u32[144,128]{1,0:T(1,128)}', space=vmem, size = 0x12000, scoped, tag = 'internal scratch']
  %s0 = inlined_call_operand.hbm [shape: f32[16,64], index: 0, kind: input, shape index: {}]
  %s1 = inlined_call_operand.hbm [shape: bf16[64,128], index: 1, kind: input, shape index: {}]
  %s2 = inlined_call_operand.vmem [shape: f32[1,128], index: 2, kind: input, shape index: {}]
  %s3 = inlined_call_operand.hbm [shape: bf16[128,128], index: 3, kind: input, shape index: {}]
  %s4 = inlined_call_operand.vmem [shape: f32[1,128], index: 4, kind: input, shape index: {}]
  %s5 = inlined_call_operand.hbm [shape: bf16[128,128], index: 5, kind: input, shape index: {}]
  %s6 = inlined_call_operand.vmem [shape: f32[1,128], index: 6, kind: input, shape index: {}]
  %s7 = inlined_call_operand.hbm [shape: bf16[128,128], index: 7, kind: input, shape index: {}]
  %s8 = inlined_call_operand.vmem [shape: f32[1,128], index: 8, kind: input, shape index: {}]
  %s9 = inlined_call_operand.hbm [shape: bf16[128,128], index: 9, kind: input, shape index: {}]
  %s10 = inlined_call_operand.vmem [shape: f32[1,128], index: 10, kind: input, shape index: {}]
  %s11 = inlined_call_operand.vmem [shape: bf16[16,128], index: 11, kind: output, shape index: {}]
  %s12 = sld [smem:[#allocation0]]
  $region78: #{genetic_model_forward.1} parent=0
    _
  %s14 = ssub.s32 1, %s12
  %s15 = scalar_select 0, %s14, %s12
  $region1: #{genetic_model_forward.1} parent=0
    #allocation2 [shape = 'u8[8192]{0}', space=vmem, size = 0x2000, scoped, tag = 'input window, operand 0, single buffered']
    #allocation3 [shape = 's32[1]{0}', space=sflag, size = 0x4, scoped, tag = 'scoped memory for genetic_model_forward.1']
    #allocation4 [shape = 'u8[16384]{0}', space=vmem, size = 0x4000, scoped, tag = 'input window, operand 1, single buffered']
    #allocation5 [shape = 's32[1]{0}', space=sflag, size = 0x4, scoped, tag = 'scoped memory for genetic_model_forward.1']
    #allocation6 [shape = 'u8[32768]{0}', space=vmem, size = 0x8000, scoped, tag = 'input window, operand 3, single buffered']
    #allocation7 [shape = 'u8[32768]{0}', space=vmem, size = 0x8000, scoped, tag = 'input window, operand 5, single buffered']
    #allocation8 [shape = 's32[1]{0}', space=sflag, size = 0x4, scoped, tag = 'scoped memory for genetic_model_forward.1']
    #allocation9 [shape = 'u8[32768]{0}', space=vmem, size = 0x8000, scoped, tag = 'input window, operand 7, single buffered']
    #allocation10 [shape = 'u8[32768]{0}', space=vmem, size = 0x8000, scoped, tag = 'input window, operand 9, single buffered']
    #allocation11 [shape = 's32[1]{0}', space=sflag, size = 0x4, scoped, tag = 'scoped memory for genetic_model_forward.1']
    %16 = vsyncpa [#allocation3], 0
    %17 = vsyncpa [#allocation5], 0
    %18 = vsyncpa [#allocation8], 0
    %19 = vsyncpa [#allocation11], 0
    // Predicated region
    $region2: #{genetic_model_forward.1} parent=1 // pred_check
      _
    $region3: #{genetic_model_forward.1} parent=1 // pred_check_branch
      %21 = sbr.rel (0) target = $region5
    $region4: #{genetic_model_forward.1} parent=1 // pred_region
      %s23 = ssub.s32 256, 256
      %24 = vsyncadd [#allocation3], %s23
      %s25 = sshll.u32 [#allocation2], 4
      %s26 = int_to_ptr.vmem [resolvable:$true] %s25
      %31 = dma.hbm_to_vmem [thread:$0]  %s0, 256, %s26, [#allocation3], 128, 128, 8
    $region5: #{genetic_model_forward.1} parent=1 // pred_fallthru
      _
    // Predicated region
    $region6: #{genetic_model_forward.1} parent=1 // pred_check
      _
    $region7: #{genetic_model_forward.1} parent=1 // pred_check_branch
      %33 = sbr.rel (0) target = $region9
    $region8: #{genetic_model_forward.1} parent=1 // pred_region
      %s35 = ssub.s32 512, 512
      %36 = vsyncadd [#allocation5], %s35
      %s37 = sshll.u32 [#allocation4], 4
      %s38 = int_to_ptr.vmem [resolvable:$true] %s37
      %43 = dma.hbm_to_vmem [thread:$0]  %s1, 512, %s38, [#allocation5], 64, 64, 4
    $region9: #{genetic_model_forward.1} parent=1 // pred_fallthru
      _
    // Predicated region
    $region10: #{genetic_model_forward.1} parent=1 // pred_check
      _
    $region11: #{genetic_model_forward.1} parent=1 // pred_check_branch
      %45 = sbr.rel (0) target = $region13
    $region12: #{genetic_model_forward.1} parent=1 // pred_region
      _
    $region13: #{genetic_model_forward.1} parent=1 // pred_fallthru
      _
    // Predicated region
    $region14: #{genetic_model_forward.1} parent=1 // pred_check
      _
    $region15: #{genetic_model_forward.1} parent=1 // pred_check_branch
      %47 = sbr.rel (0) target = $region17
    $region16: #{genetic_model_forward.1} parent=1 // pred_region
      %s49 = ssub.s32 1024, 1024
      %50 = vsyncadd [#allocation5], %s49
      %s51 = sshll.u32 [#allocation6], 4
      %s52 = int_to_ptr.vmem [resolvable:$true] %s51
      %57 = dma.hbm_to_vmem [thread:$0]  %s3, 1024, %s52, [#allocation5], 64, 64, 4
    $region17: #{genetic_model_forward.1} parent=1 // pred_fallthru
      _
    // Predicated region
    $region18: #{genetic_model_forward.1} parent=1 // pred_check
      _
    $region19: #{genetic_model_forward.1} parent=1 // pred_check_branch
      %59 = sbr.rel (0) target = $region21
    $region20: #{genetic_model_forward.1} parent=1 // pred_region
      _
    $region21: #{genetic_model_forward.1} parent=1 // pred_fallthru
      _
    // Predicated region
    $region22: #{genetic_model_forward.1} parent=1 // pred_check
      _
    $region23: #{genetic_model_forward.1} parent=1 // pred_check_branch
      %61 = sbr.rel (0) target = $region25
    $region24: #{genetic_model_forward.1} parent=1 // pred_region
      %s63 = ssub.s32 1024, 1024
      %64 = vsyncadd [#allocation8], %s63
      %s65 = sshll.u32 [#allocation7], 4
      %s66 = int_to_ptr.vmem [resolvable:$true] %s65
      %71 = dma.hbm_to_vmem [thread:$0]  %s5, 1024, %s66, [#allocation8], 64, 64, 4
    $region25: #{genetic_model_forward.1} parent=1 // pred_fallthru
      _
    // Predicated region
    $region26: #{genetic_model_forward.1} parent=1 // pred_check
      _
    $region27: #{genetic_model_forward.1} parent=1 // pred_check_branch
      %73 = sbr.rel (0) target = $region29
    $region28: #{genetic_model_forward.1} parent=1 // pred_region
      _
    $region29: #{genetic_model_forward.1} parent=1 // pred_fallthru
      _
    // Predicated region
    $region30: #{genetic_model_forward.1} parent=1 // pred_check
      _
    $region31: #{genetic_model_forward.1} parent=1 // pred_check_branch
      %75 = sbr.rel (0) target = $region33
    $region32: #{genetic_model_forward.1} parent=1 // pred_region
      %s77 = ssub.s32 1024, 1024
      %78 = vsyncadd [#allocation8], %s77
      %s79 = sshll.u32 [#allocation9], 4
      %s80 = int_to_ptr.vmem [resolvable:$true] %s79
      %85 = dma.hbm_to_vmem [thread:$0]  %s7, 1024, %s80, [#allocation8], 64, 64, 4
    $region33: #{genetic_model_forward.1} parent=1 // pred_fallthru
      _
    // Predicated region
    $region34: #{genetic_model_forward.1} parent=1 // pred_check
      _
    $region35: #{genetic_model_forward.1} parent=1 // pred_check_branch
      %87 = sbr.rel (0) target = $region37
    $region36: #{genetic_model_forward.1} parent=1 // pred_region
      _
    $region37: #{genetic_model_forward.1} parent=1 // pred_fallthru
      _
    // Predicated region
    $region38: #{genetic_model_forward.1} parent=1 // pred_check
      _
    $region39: #{genetic_model_forward.1} parent=1 // pred_check_branch
      %89 = sbr.rel (0) target = $region41
    $region40: #{genetic_model_forward.1} parent=1 // pred_region
      %s91 = ssub.s32 1024, 1024
      %92 = vsyncadd [#allocation11], %s91
      %s93 = sshll.u32 [#allocation10], 4
      %s94 = int_to_ptr.vmem [resolvable:$true] %s93
      %99 = dma.hbm_to_vmem [thread:$0]  %s9, 1024, %s94, [#allocation11], 64, 64, 4
    $region41: #{genetic_model_forward.1} parent=1 // pred_fallthru
      _
    // Predicated region
    $region42: #{genetic_model_forward.1} parent=1 // pred_check
      _
    $region43: #{genetic_model_forward.1} parent=1 // pred_check_branch
      %101 = sbr.rel (0) target = $region45
    $region44: #{genetic_model_forward.1} parent=1 // pred_region
      _
    $region45: #{genetic_model_forward.1} parent=1 // pred_fallthru
      _
    // Predicated region
    $region46: #{genetic_model_forward.1} parent=1 // pred_check
      _
    $region47: #{genetic_model_forward.1} parent=1 // pred_check_branch
      %103 = sbr.rel (0) target = $region49
    $region48: #{genetic_model_forward.1} parent=1 // pred_region
      %104 = dma.done [#allocation3], 256
    $region49: #{genetic_model_forward.1} parent=1 // pred_fallthru
      _
    // Predicated region
    $region50: #{genetic_model_forward.1} parent=1 // pred_check
      _
    $region51: #{genetic_model_forward.1} parent=1 // pred_check_branch
      %106 = sbr.rel (0) target = $region53
    $region52: #{genetic_model_forward.1} parent=1 // pred_region
      %107 = dma.done [#allocation5], 512
    $region53: #{genetic_model_forward.1} parent=1 // pred_fallthru
      _
    // Predicated region
    $region54: #{genetic_model_forward.1} parent=1 // pred_check
      _
    $region55: #{genetic_model_forward.1} parent=1 // pred_check_branch
      %109 = sbr.rel (0) target = $region57
    $region56: #{genetic_model_forward.1} parent=1 // pred_region
      %110 = dma.done [#allocation5], 1024
    $region57: #{genetic_model_forward.1} parent=1 // pred_fallthru
      _
    // Predicated region
    $region58: #{genetic_model_forward.1} parent=1 // pred_check
      _
    $region59: #{genetic_model_forward.1} parent=1 // pred_check_branch
      %112 = sbr.rel (0) target = $region61
    $region60: #{genetic_model_forward.1} parent=1 // pred_region
      %113 = dma.done [#allocation8], 1024
    $region61: #{genetic_model_forward.1} parent=1 // pred_fallthru
      _
    // Predicated region
    $region62: #{genetic_model_forward.1} parent=1 // pred_check
      _
    $region63: #{genetic_model_forward.1} parent=1 // pred_check_branch
      %115 = sbr.rel (0) target = $region65
    $region64: #{genetic_model_forward.1} parent=1 // pred_region
      %116 = dma.done [#allocation8], 1024
    $region65: #{genetic_model_forward.1} parent=1 // pred_fallthru
      _
    // Predicated region
    $region66: #{genetic_model_forward.1} parent=1 // pred_check
      _
    $region67: #{genetic_model_forward.1} parent=1 // pred_check_branch
      %118 = sbr.rel (0) target = $region69
    $region68: #{genetic_model_forward.1} parent=1 // pred_region
      %119 = dma.done [#allocation11], 1024
    $region69: #{genetic_model_forward.1} parent=1 // pred_fallthru
      _
    %v121 = vld [vmem:[#allocation2] sm:$0xff]
    %v122 = vld [vmem:[#allocation2 + $0x8] sm:$0xff]
    %v123 = vpack.c.bf16 %v122, %v121
    %v124 = vld [vmem:[#allocation4] sm:$0xf]
    %v125 = vld [vmem:[#allocation4 + $0x4] sm:$0xf]
    %v126 = vld [vmem:[#allocation4 + $0x8] sm:$0xf]
    %v127 = vld [vmem:[#allocation4 + $0xc] sm:$0xf]
    %v128 = vld [vmem:[#allocation4 + $0x10] sm:$0xf]
    %v129 = vld [vmem:[#allocation4 + $0x14] sm:$0xf]
    %v130 = vld [vmem:[#allocation4 + $0x18] sm:$0xf]
    %v131 = vld [vmem:[#allocation4 + $0x1c] sm:$0xf]
    %v132 = vld [vmem:[%s2] sm:$0x1]
    %v134 = vlaneseq
    %v135 = vshrl.u32 %v134, 7
    %v136 = vsub.s32 0, %v135
    %v137 = vrot.slane %v132, %v136
    %v147 = vunpack.c.l.b16 %v124
    %v148 = vunpack.c.l.b16 %v125
    %v149 = vunpack.c.l.b16 %v126
    %v150 = vunpack.c.l.b16 %v127
    %v151 = vunpack.c.l.b16 %v128
    %v152 = vunpack.c.l.b16 %v129
    %v153 = vunpack.c.l.b16 %v130
    %v154 = vunpack.c.l.b16 %v131
    %v155 = vpack.c.b16 %v148, %v147
    %v156 = vpack.c.b16 %v150, %v149
    %v157 = vpack.c.b16 %v152, %v151
    %v158 = vpack.c.b16 %v154, %v153
    %vm163 = vcmask 523264
    %v165 = vsel %vm163, %v123, 0
    %167 = vmatprep.subr.bf16.mxu0 0
    %168 = vmatpush1.bf16.msra.mxu0 0
    %169 = vmatprep.subr.bf16.mxu0 0
    %170 = vmatpush1.bf16.msra.mxu0 0
    %171 = vmatprep.subr.bf16.mxu0 0
    %172 = vmatpush1.bf16.msra.mxu0 0
    %173 = vmatprep.subr.bf16.mxu0 0
    %174 = vmatpush1.bf16.msra.mxu0 0
    %175 = vmatprep.subr.bf16.mxu0 0
    %176 = vmatpush1.bf16.msra.mxu0 %v158
    %177 = vmatprep.subr.bf16.mxu0 0
    %178 = vmatpush1.bf16.msra.mxu0 %v157
    %179 = vmatprep.subr.bf16.mxu0 0
    %180 = vmatpush1.bf16.msra.mxu0 %v156
    %181 = vmatprep.subr.bf16.mxu0 0
    %182 = vmatpush1.bf16.msra.mxu0 %v155
    %183 = vmatprep.subr.bf16.mxu0 0
    %184 = vmatpush2.bf16.msra.mxu0 0
    %185 = vmatprep.subr.bf16.mxu0 0
    %186 = vmatpush2.bf16.msra.mxu0 0
    %187 = vmatprep.subr.bf16.mxu0 0
    %188 = vmatpush2.bf16.msra.mxu0 0
    %189 = vmatprep.subr.bf16.mxu0 0
    %190 = vmatpush2.bf16.msra.mxu0 0
    %191 = vmatprep.subr.bf16.mxu0 0
    %192 = vmatpush2.bf16.msra.mxu0 0
    %193 = vmatprep.subr.bf16.mxu0 0
    %194 = vmatpush2.bf16.msra.mxu0 0
    %195 = vmatprep.subr.bf16.mxu0 0
    %196 = vmatpush2.bf16.msra.mxu0 0
    %197 = vmatprep.subr.bf16.mxu0 0
    %198 = vmatpush2.bf16.msra.mxu0 0
    %199 = vmatprep.mubr.bf16.mxu0 0
    %200 = vmatmul.mubr.bf16.gmra.mxu0 %v165
    %v201 = vpop.f32.mrf.mxu0
    %v202 = vadd.f32 %v137, %v201
    %v203 = vpop.f32.mrf.mxu0
    %v204 = vpop.f32.mrf.mxu0
    %v205 = vadd.f32 %v137, %v204
    %v206 = vpop.f32.mrf.mxu0
    %207 = vdwg.mxu0
    %v208 = vmax.f32 %v202, 0.0
    %v209 = vmax.f32 %v205, 0.0
    %v210 = vpack.c.bf16 %v209, %v208
    %v211 = vld [vmem:[#allocation6] sm:$0xf]
    %v212 = vld [vmem:[#allocation6 + $0x4] sm:$0xf]
    %v213 = vld [vmem:[#allocation6 + $0x8] sm:$0xf]
    %v214 = vld [vmem:[#allocation6 + $0xc] sm:$0xf]
    %v215 = vld [vmem:[#allocation6 + $0x10] sm:$0xf]
    %v216 = vld [vmem:[#allocation6 + $0x14] sm:$0xf]
    %v217 = vld [vmem:[#allocation6 + $0x18] sm:$0xf]
    %v218 = vld [vmem:[#allocation6 + $0x1c] sm:$0xf]
    %v219 = vld [vmem:[#allocation6 + $0x20] sm:$0xf]
    %v220 = vld [vmem:[#allocation6 + $0x24] sm:$0xf]
    %v221 = vld [vmem:[#allocation6 + $0x28] sm:$0xf]
    %v222 = vld [vmem:[#allocation6 + $0x2c] sm:$0xf]
    %v223 = vld [vmem:[#allocation6 + $0x30] sm:$0xf]
    %v224 = vld [vmem:[#allocation6 + $0x34] sm:$0xf]
    %v225 = vld [vmem:[#allocation6 + $0x38] sm:$0xf]
    %v226 = vld [vmem:[#allocation6 + $0x3c] sm:$0xf]
    %v227 = vld [vmem:[%s4] sm:$0x1]
    %v229 = vlaneseq
    %v230 = vshrl.u32 %v229, 7
    %v231 = vsub.s32 0, %v230
    %v232 = vrot.slane %v227, %v231
    %v250 = vunpack.c.l.b16 %v211
    %v251 = vunpack.c.l.b16 %v212
    %v252 = vunpack.c.l.b16 %v213
    %v253 = vunpack.c.l.b16 %v214
    %v254 = vunpack.c.l.b16 %v215
    %v255 = vunpack.c.l.b16 %v216
    %v256 = vunpack.c.l.b16 %v217
    %v257 = vunpack.c.l.b16 %v218
    %v258 = vunpack.c.l.b16 %v219
    %v259 = vunpack.c.l.b16 %v220
    %v260 = vunpack.c.l.b16 %v221
    %v261 = vunpack.c.l.b16 %v222
    %v262 = vunpack.c.l.b16 %v223
    %v263 = vunpack.c.l.b16 %v224
    %v264 = vunpack.c.l.b16 %v225
    %v265 = vunpack.c.l.b16 %v226
    %v266 = vpack.c.b16 %v251, %v250
    %v267 = vpack.c.b16 %v253, %v252
    %v268 = vpack.c.b16 %v255, %v254
    %v269 = vpack.c.b16 %v257, %v256
    %v270 = vpack.c.b16 %v259, %v258
    %v271 = vpack.c.b16 %v261, %v260
    %v272 = vpack.c.b16 %v263, %v262
    %v273 = vpack.c.b16 %v265, %v264
    %282 = vmatprep.subr.bf16.mxu0 0
    %283 = vmatpush1.bf16.msra.mxu0 %v273
    %284 = vmatprep.subr.bf16.mxu0 0
    %285 = vmatpush1.bf16.msra.mxu0 %v272
    %286 = vmatprep.subr.bf16.mxu0 0
    %287 = vmatpush1.bf16.msra.mxu0 %v271
    %288 = vmatprep.subr.bf16.mxu0 0
    %289 = vmatpush1.bf16.msra.mxu0 %v270
    %290 = vmatprep.subr.bf16.mxu0 0
    %291 = vmatpush1.bf16.msra.mxu0 %v269
    %292 = vmatprep.subr.bf16.mxu0 0
    %293 = vmatpush1.bf16.msra.mxu0 %v268
    %294 = vmatprep.subr.bf16.mxu0 0
    %295 = vmatpush1.bf16.msra.mxu0 %v267
    %296 = vmatprep.subr.bf16.mxu0 0
    %297 = vmatpush1.bf16.msra.mxu0 %v266
    %298 = vmatprep.subr.bf16.mxu0 0
    %299 = vmatpush2.bf16.msra.mxu0 0
    %300 = vmatprep.subr.bf16.mxu0 0
    %301 = vmatpush2.bf16.msra.mxu0 0
    %302 = vmatprep.subr.bf16.mxu0 0
    %303 = vmatpush2.bf16.msra.mxu0 0
    %304 = vmatprep.subr.bf16.mxu0 0
    %305 = vmatpush2.bf16.msra.mxu0 0
    %306 = vmatprep.subr.bf16.mxu0 0
    %307 = vmatpush2.bf16.msra.mxu0 0
    %308 = vmatprep.subr.bf16.mxu0 0
    %309 = vmatpush2.bf16.msra.mxu0 0
    %310 = vmatprep.subr.bf16.mxu0 0
    %311 = vmatpush2.bf16.msra.mxu0 0
    %312 = vmatprep.subr.bf16.mxu0 0
    %313 = vmatpush2.bf16.msra.mxu0 0
    %314 = vmatprep.mubr.bf16.mxu0 0
    %315 = vmatmul.mubr.bf16.gmra.mxu0 %v210
    %v316 = vpop.f32.mrf.mxu0
    %v317 = vadd.f32 %v232, %v316
    %v318 = vpop.f32.mrf.mxu0
    %v319 = vpop.f32.mrf.mxu0
    %v320 = vadd.f32 %v232, %v319
    %v321 = vpop.f32.mrf.mxu0
    %322 = vdwg.mxu0
    %v323 = vmax.f32 %v317, 0.0
    %v324 = vmax.f32 %v320, 0.0
    %v325 = vpack.c.bf16 %v324, %v323
    %v326 = vld [vmem:[#allocation7] sm:$0xf]
    %v327 = vld [vmem:[#allocation7 + $0x4] sm:$0xf]
    %v328 = vld [vmem:[#allocation7 + $0x8] sm:$0xf]
    %v329 = vld [vmem:[#allocation7 + $0xc] sm:$0xf]
    %v330 = vld [vmem:[#allocation7 + $0x10] sm:$0xf]
    %v331 = vld [vmem:[#allocation7 + $0x14] sm:$0xf]
    %v332 = vld [vmem:[#allocation7 + $0x18] sm:$0xf]
    %v333 = vld [vmem:[#allocation7 + $0x1c] sm:$0xf]
    %v334 = vld [vmem:[#allocation7 + $0x20] sm:$0xf]
    %v335 = vld [vmem:[#allocation7 + $0x24] sm:$0xf]
    %v336 = vld [vmem:[#allocation7 + $0x28] sm:$0xf]
    %v337 = vld [vmem:[#allocation7 + $0x2c] sm:$0xf]
    %v338 = vld [vmem:[#allocation7 + $0x30] sm:$0xf]
    %v339 = vld [vmem:[#allocation7 + $0x34] sm:$0xf]
    %v340 = vld [vmem:[#allocation7 + $0x38] sm:$0xf]
    %v341 = vld [vmem:[#allocation7 + $0x3c] sm:$0xf]
    %v342 = vld [vmem:[%s6] sm:$0x1]
    %v344 = vlaneseq
    %v345 = vshrl.u32 %v344, 7
    %v346 = vsub.s32 0, %v345
    %v347 = vrot.slane %v342, %v346
    %v365 = vunpack.c.l.b16 %v326
    %v366 = vunpack.c.l.b16 %v327
    %v367 = vunpack.c.l.b16 %v328
    %v368 = vunpack.c.l.b16 %v329
    %v369 = vunpack.c.l.b16 %v330
    %v370 = vunpack.c.l.b16 %v331
    %v371 = vunpack.c.l.b16 %v332
    %v372 = vunpack.c.l.b16 %v333
    %v373 = vunpack.c.l.b16 %v334
    %v374 = vunpack.c.l.b16 %v335
    %v375 = vunpack.c.l.b16 %v336
    %v376 = vunpack.c.l.b16 %v337
    %v377 = vunpack.c.l.b16 %v338
    %v378 = vunpack.c.l.b16 %v339
    %v379 = vunpack.c.l.b16 %v340
    %v380 = vunpack.c.l.b16 %v341
    %v381 = vpack.c.b16 %v366, %v365
    %v382 = vpack.c.b16 %v368, %v367
    %v383 = vpack.c.b16 %v370, %v369
    %v384 = vpack.c.b16 %v372, %v371
    %v385 = vpack.c.b16 %v374, %v373
    %v386 = vpack.c.b16 %v376, %v375
    %v387 = vpack.c.b16 %v378, %v377
    %v388 = vpack.c.b16 %v380, %v379
    %397 = vmatprep.subr.bf16.mxu0 0
    %398 = vmatpush1.bf16.msra.mxu0 %v388
    %399 = vmatprep.subr.bf16.mxu0 0
    %400 = vmatpush1.bf16.msra.mxu0 %v387
    %401 = vmatprep.subr.bf16.mxu0 0
    %402 = vmatpush1.bf16.msra.mxu0 %v386
    %403 = vmatprep.subr.bf16.mxu0 0
    %404 = vmatpush1.bf16.msra.mxu0 %v385
    %405 = vmatprep.subr.bf16.mxu0 0
    %406 = vmatpush1.bf16.msra.mxu0 %v384
    %407 = vmatprep.subr.bf16.mxu0 0
    %408 = vmatpush1.bf16.msra.mxu0 %v383
    %409 = vmatprep.subr.bf16.mxu0 0
    %410 = vmatpush1.bf16.msra.mxu0 %v382
    %411 = vmatprep.subr.bf16.mxu0 0
    %412 = vmatpush1.bf16.msra.mxu0 %v381
    %413 = vmatprep.subr.bf16.mxu0 0
    %414 = vmatpush2.bf16.msra.mxu0 0
    %415 = vmatprep.subr.bf16.mxu0 0
    %416 = vmatpush2.bf16.msra.mxu0 0
    %417 = vmatprep.subr.bf16.mxu0 0
    %418 = vmatpush2.bf16.msra.mxu0 0
    %419 = vmatprep.subr.bf16.mxu0 0
    %420 = vmatpush2.bf16.msra.mxu0 0
    %421 = vmatprep.subr.bf16.mxu0 0
    %422 = vmatpush2.bf16.msra.mxu0 0
    %423 = vmatprep.subr.bf16.mxu0 0
    %424 = vmatpush2.bf16.msra.mxu0 0
    %425 = vmatprep.subr.bf16.mxu0 0
    %426 = vmatpush2.bf16.msra.mxu0 0
    %427 = vmatprep.subr.bf16.mxu0 0
    %428 = vmatpush2.bf16.msra.mxu0 0
    %429 = vmatprep.mubr.bf16.mxu0 0
    %430 = vmatmul.mubr.bf16.gmra.mxu0 %v325
    %v431 = vpop.f32.mrf.mxu0
    %v432 = vadd.f32 %v347, %v431
    %v433 = vpop.f32.mrf.mxu0
    %v434 = vpop.f32.mrf.mxu0
    %v435 = vadd.f32 %v347, %v434
    %v436 = vpop.f32.mrf.mxu0
    %437 = vdwg.mxu0
    %v438 = vmax.f32 %v432, 0.0
    %v439 = vmax.f32 %v435, 0.0
    %v440 = vpack.c.bf16 %v439, %v438
    %v441 = vld [vmem:[#allocation9] sm:$0xf]
    %v442 = vld [vmem:[#allocation9 + $0x4] sm:$0xf]
    %v443 = vld [vmem:[#allocation9 + $0x8] sm:$0xf]
    %v444 = vld [vmem:[#allocation9 + $0xc] sm:$0xf]
    %v445 = vld [vmem:[#allocation9 + $0x10] sm:$0xf]
    %v446 = vld [vmem:[#allocation9 + $0x14] sm:$0xf]
    %v447 = vld [vmem:[#allocation9 + $0x18] sm:$0xf]
    %v448 = vld [vmem:[#allocation9 + $0x1c] sm:$0xf]
    %v449 = vld [vmem:[#allocation9 + $0x20] sm:$0xf]
    %v450 = vld [vmem:[#allocation9 + $0x24] sm:$0xf]
    %v451 = vld [vmem:[#allocation9 + $0x28] sm:$0xf]
    %v452 = vld [vmem:[#allocation9 + $0x2c] sm:$0xf]
    %v453 = vld [vmem:[#allocation9 + $0x30] sm:$0xf]
    %v454 = vld [vmem:[#allocation9 + $0x34] sm:$0xf]
    %v455 = vld [vmem:[#allocation9 + $0x38] sm:$0xf]
    %v456 = vld [vmem:[#allocation9 + $0x3c] sm:$0xf]
    %v457 = vld [vmem:[%s8] sm:$0x1]
    %v459 = vlaneseq
    %v460 = vshrl.u32 %v459, 7
    %v461 = vsub.s32 0, %v460
    %v462 = vrot.slane %v457, %v461
    %v480 = vunpack.c.l.b16 %v441
    %v481 = vunpack.c.l.b16 %v442
    %v482 = vunpack.c.l.b16 %v443
    %v483 = vunpack.c.l.b16 %v444
    %v484 = vunpack.c.l.b16 %v445
    %v485 = vunpack.c.l.b16 %v446
    %v486 = vunpack.c.l.b16 %v447
    %v487 = vunpack.c.l.b16 %v448
    %v488 = vunpack.c.l.b16 %v449
    %v489 = vunpack.c.l.b16 %v450
    %v490 = vunpack.c.l.b16 %v451
    %v491 = vunpack.c.l.b16 %v452
    %v492 = vunpack.c.l.b16 %v453
    %v493 = vunpack.c.l.b16 %v454
    %v494 = vunpack.c.l.b16 %v455
    %v495 = vunpack.c.l.b16 %v456
    %v496 = vpack.c.b16 %v481, %v480
    %v497 = vpack.c.b16 %v483, %v482
    %v498 = vpack.c.b16 %v485, %v484
    %v499 = vpack.c.b16 %v487, %v486
    %v500 = vpack.c.b16 %v489, %v488
    %v501 = vpack.c.b16 %v491, %v490
    %v502 = vpack.c.b16 %v493, %v492
    %v503 = vpack.c.b16 %v495, %v494
    %512 = vmatprep.subr.bf16.mxu0 0
    %513 = vmatpush1.bf16.msra.mxu0 %v503
    %514 = vmatprep.subr.bf16.mxu0 0
    %515 = vmatpush1.bf16.msra.mxu0 %v502
    %516 = vmatprep.subr.bf16.mxu0 0
    %517 = vmatpush1.bf16.msra.mxu0 %v501
    %518 = vmatprep.subr.bf16.mxu0 0
    %519 = vmatpush1.bf16.msra.mxu0 %v500
    %520 = vmatprep.subr.bf16.mxu0 0
    %521 = vmatpush1.bf16.msra.mxu0 %v499
    %522 = vmatprep.subr.bf16.mxu0 0
    %523 = vmatpush1.bf16.msra.mxu0 %v498
    %524 = vmatprep.subr.bf16.mxu0 0
    %525 = vmatpush1.bf16.msra.mxu0 %v497
    %526 = vmatprep.subr.bf16.mxu0 0
    %527 = vmatpush1.bf16.msra.mxu0 %v496
    %528 = vmatprep.subr.bf16.mxu0 0
    %529 = vmatpush2.bf16.msra.mxu0 0
    %530 = vmatprep.subr.bf16.mxu0 0
    %531 = vmatpush2.bf16.msra.mxu0 0
    %532 = vmatprep.subr.bf16.mxu0 0
    %533 = vmatpush2.bf16.msra.mxu0 0
    %534 = vmatprep.subr.bf16.mxu0 0
    %535 = vmatpush2.bf16.msra.mxu0 0
    %536 = vmatprep.subr.bf16.mxu0 0
    %537 = vmatpush2.bf16.msra.mxu0 0
    %538 = vmatprep.subr.bf16.mxu0 0
    %539 = vmatpush2.bf16.msra.mxu0 0
    %540 = vmatprep.subr.bf16.mxu0 0
    %541 = vmatpush2.bf16.msra.mxu0 0
    %542 = vmatprep.subr.bf16.mxu0 0
    %543 = vmatpush2.bf16.msra.mxu0 0
    %544 = vmatprep.mubr.bf16.mxu0 0
    %545 = vmatmul.mubr.bf16.gmra.mxu0 %v440
    %v546 = vpop.f32.mrf.mxu0
    %v547 = vadd.f32 %v462, %v546
    %v548 = vpop.f32.mrf.mxu0
    %v549 = vpop.f32.mrf.mxu0
    %v550 = vadd.f32 %v462, %v549
    %v551 = vpop.f32.mrf.mxu0
    %552 = vdwg.mxu0
    %v553 = vmax.f32 %v547, 0.0
    %v554 = vmax.f32 %v550, 0.0
    %v555 = vpack.c.bf16 %v554, %v553
    %v556 = vld [vmem:[#allocation10] sm:$0xf]
    %v557 = vld [vmem:[#allocation10 + $0x4] sm:$0xf]
    %v558 = vld [vmem:[#allocation10 + $0x8] sm:$0xf]
    %v559 = vld [vmem:[#allocation10 + $0xc] sm:$0xf]
    %v560 = vld [vmem:[#allocation10 + $0x10] sm:$0xf]
    %v561 = vld [vmem:[#allocation10 + $0x14] sm:$0xf]
    %v562 = vld [vmem:[#allocation10 + $0x18] sm:$0xf]
    %v563 = vld [vmem:[#allocation10 + $0x1c] sm:$0xf]
    %v564 = vld [vmem:[#allocation10 + $0x20] sm:$0xf]
    %v565 = vld [vmem:[#allocation10 + $0x24] sm:$0xf]
    %v566 = vld [vmem:[#allocation10 + $0x28] sm:$0xf]
    %v567 = vld [vmem:[#allocation10 + $0x2c] sm:$0xf]
    %v568 = vld [vmem:[#allocation10 + $0x30] sm:$0xf]
    %v569 = vld [vmem:[#allocation10 + $0x34] sm:$0xf]
    %v570 = vld [vmem:[#allocation10 + $0x38] sm:$0xf]
    %v571 = vld [vmem:[#allocation10 + $0x3c] sm:$0xf]
    %v572 = vld [vmem:[%s10] sm:$0x1]
    %v574 = vlaneseq
    %v575 = vshrl.u32 %v574, 7
    %v576 = vsub.s32 0, %v575
    %v577 = vrot.slane %v572, %v576
    %v595 = vunpack.c.l.b16 %v556
    %v596 = vunpack.c.l.b16 %v557
    %v597 = vunpack.c.l.b16 %v558
    %v598 = vunpack.c.l.b16 %v559
    %v599 = vunpack.c.l.b16 %v560
    %v600 = vunpack.c.l.b16 %v561
    %v601 = vunpack.c.l.b16 %v562
    %v602 = vunpack.c.l.b16 %v563
    %v603 = vunpack.c.l.b16 %v564
    %v604 = vunpack.c.l.b16 %v565
    %v605 = vunpack.c.l.b16 %v566
    %v606 = vunpack.c.l.b16 %v567
    %v607 = vunpack.c.l.b16 %v568
    %v608 = vunpack.c.l.b16 %v569
    %v609 = vunpack.c.l.b16 %v570
    %v610 = vunpack.c.l.b16 %v571
    %v611 = vpack.c.b16 %v596, %v595
    %v612 = vpack.c.b16 %v598, %v597
    %v613 = vpack.c.b16 %v600, %v599
    %v614 = vpack.c.b16 %v602, %v601
    %v615 = vpack.c.b16 %v604, %v603
    %v616 = vpack.c.b16 %v606, %v605
    %v617 = vpack.c.b16 %v608, %v607
    %v618 = vpack.c.b16 %v610, %v609
    %627 = vmatprep.subr.bf16.mxu0 0
    %628 = vmatpush1.bf16.msra.mxu0 %v618
    %629 = vmatprep.subr.bf16.mxu0 0
    %630 = vmatpush1.bf16.msra.mxu0 %v617
    %631 = vmatprep.subr.bf16.mxu0 0
    %632 = vmatpush1.bf16.msra.mxu0 %v616
    %633 = vmatprep.subr.bf16.mxu0 0
    %634 = vmatpush1.bf16.msra.mxu0 %v615
    %635 = vmatprep.subr.bf16.mxu0 0
    %636 = vmatpush1.bf16.msra.mxu0 %v614
    %637 = vmatprep.subr.bf16.mxu0 0
    %638 = vmatpush1.bf16.msra.mxu0 %v613
    %639 = vmatprep.subr.bf16.mxu0 0
    %640 = vmatpush1.bf16.msra.mxu0 %v612
    %641 = vmatprep.subr.bf16.mxu0 0
    %642 = vmatpush1.bf16.msra.mxu0 %v611
    %643 = vmatprep.subr.bf16.mxu0 0
    %644 = vmatpush2.bf16.msra.mxu0 0
    %645 = vmatprep.subr.bf16.mxu0 0
    %646 = vmatpush2.bf16.msra.mxu0 0
    %647 = vmatprep.subr.bf16.mxu0 0
    %648 = vmatpush2.bf16.msra.mxu0 0
    %649 = vmatprep.subr.bf16.mxu0 0
    %650 = vmatpush2.bf16.msra.mxu0 0
    %651 = vmatprep.subr.bf16.mxu0 0
    %652 = vmatpush2.bf16.msra.mxu0 0
    %653 = vmatprep.subr.bf16.mxu0 0
    %654 = vmatpush2.bf16.msra.mxu0 0
    %655 = vmatprep.subr.bf16.mxu0 0
    %656 = vmatpush2.bf16.msra.mxu0 0
    %657 = vmatprep.subr.bf16.mxu0 0
    %658 = vmatpush2.bf16.msra.mxu0 0
    %659 = vmatprep.mubr.bf16.mxu0 0
    %660 = vmatmul.mubr.bf16.gmra.mxu0 %v555
    %v661 = vpop.f32.mrf.mxu0
    %v662 = vadd.f32 %v577, %v661
    %v663 = vpop.f32.mrf.mxu0
    %v664 = vpop.f32.mrf.mxu0
    %v665 = vadd.f32 %v577, %v664
    %v666 = vpop.f32.mrf.mxu0
    %667 = vdwg.mxu0
    %v668 = vpack.c.bf16 %v665, %v662
    %v670 = vunpack.c.l.b16 %v668
    %v671 = vunpack.c.h.b16 %v668
    %v672 = vpack.c.b16 %v670, %v670
    %v673 = vpack.c.b16 %v671, %v671
    %676 = vst [vmem:[%s11] sm:$0xf] %v672
    %677 = vst [vmem:[%s11 + $0x4] sm:$0xf] %v673
    // Predicated region
    $region70: #{genetic_model_forward.1} parent=1 // pred_check
      _
    $region71: #{genetic_model_forward.1} parent=1 // pred_check_branch
      %679 = sbr.rel (0) target = $region73
    $region72: #{genetic_model_forward.1} parent=1 // pred_region
      _
    $region73: #{genetic_model_forward.1} parent=1 // pred_fallthru
      _
    // Predicated region
    $region74: #{genetic_model_forward.1} parent=1 // pred_check
      _
    $region75: #{genetic_model_forward.1} parent=1 // pred_check_branch
      %681 = sbr.rel (0) target = $region77
    $region76: #{genetic_model_forward.1} parent=1 // pred_region
      _
    $region77: #{genetic_model_forward.1} parent=1 // pred_fallthru
      _
    %682 = vsyncpa [#allocation3], 1
    %683 = vsyncpa [#allocation5], 1
    %684 = vsyncpa [#allocation8], 1
    %685 = vsyncpa [#allocation11], 1

</llo_original>
